<compile_context>
chip_gen: v6e
topology: v6e:2x2x1
jax: 0.10.0
libtpu: 0.0.40
codegen_flags: <defaults>
</compile_context>

<pallas_src>
import functools

import jax
import jax.numpy as jnp
from jax.experimental import pallas as pl
from jax.experimental.pallas import tpu as pltpu


def _focal_ce_kernel(logits_ref, target_ref, *rest, gamma, hw_valid, tm_hw,
                     tiles_per_chunk, has_alpha, needs_mask):
    if has_alpha:
        alpha_ref, out_ref = rest
    else:
        alpha_ref = None
        (out_ref,) = rest

    i = pl.program_id(2)

    @pl.when(i == 0)
    def _():
        out_ref[...] = jnp.zeros_like(out_ref)

    x = logits_ref[0].astype(jnp.float32)            # (C, tm_hw)
    t = target_ref[0]                                # (1, tm_hw) int32

    # Numerically stable log-softmax over the class axis (sublanes).
    m = jnp.max(x, axis=0, keepdims=True)            # (1, tm_hw)
    ex = jnp.exp(x - m)                              # (C, tm_hw)
    sum_ex = jnp.sum(ex, axis=0, keepdims=True)      # (1, tm_hw)

    # One-hot gather of the target class per pixel.
    # TODO(synk): targets must lie in [0, C) (no ignore_index), same as the
    # torch module's gather.
    cls = jax.lax.broadcasted_iota(jnp.int32, x.shape, 0)   # (C, tm_hw)
    onehot = cls == t                                        # broadcast over C

    x_t = jnp.sum(jnp.where(onehot, x, 0.0), axis=0, keepdims=True)
    ex_t = jnp.sum(jnp.where(onehot, ex, 0.0), axis=0, keepdims=True)

    log_pt = x_t - m - jnp.log(sum_ex)               # exact log softmax at target
    # Reuse ex instead of exp(log_pt): one EUP op (reciprocal) replaces an exp.
    p_t = ex_t * pl.reciprocal(sum_ex, approx=True)  # softmax prob at target

    if has_alpha:
        a_t = jnp.sum(jnp.where(onehot, alpha_ref[...], 0.0),
                      axis=0, keepdims=True)         # alpha gathered at target
        log_term = a_t * log_pt
    else:
        log_term = log_pt

    # loss = -(1 - p_t)^gamma * alpha_t * log(p_t)        (1, tm_hw)
    base = jnp.maximum(1.0 - p_t, 0.0)               # guard approx-recip overshoot
    loss = -jnp.power(base, gamma) * log_term

    if needs_mask:
        # Mask the out-of-range tail columns of the last (partial) HW tile.
        j = pl.program_id(1) * tiles_per_chunk + i   # global HW-tile index
        col = jax.lax.broadcasted_iota(jnp.int32, loss.shape, 1)
        valid = (j * tm_hw + col) < hw_valid
        loss = jnp.where(valid, loss, 0.0)

    out_ref[...] += loss[None]                       # lane-dense VPU accumulate


def _vmem_budgets():
    """(tile budget bytes, scoped vmem_limit_bytes), generation-aware."""
    cap = 128 * 1024 * 1024
    try:
        cap = int(pltpu.get_tpu_info().vmem_capacity_bytes)
    except Exception:
        pass
    if cap <= 64 * 1024 * 1024:        # v7x-class: 64 MiB per TensorCore
        return 20 * 1024 * 1024, 40 * 1024 * 1024
    return 40 * 1024 * 1024, 64 * 1024 * 1024        # v5e / v6e: 128 MiB


def _choose_tile(C, HW, itemsize, budget_bytes):
    """HW tile width: multiple of 128, as wide as the VMEM budget allows,
    preferring an exact divisor of HW so the tail mask is never needed."""
    if HW <= 128:
        return int(HW)                               # full dim satisfies layout rule
    # Per-column bytes: double-buffered logits block + ~2 live (C,·) f32 temps
    # + double-buffered int32 targets + misc (1,·) f32 vectors.
    per_col = C * (2 * itemsize + 8) + 80
    t_max = int(budget_bytes // per_col)
    t_max = (t_max // 128) * 128
    if t_max < 128:
        # TODO(synk): tile the class axis (two-pass / online softmax) for very
        # large C; for now fail loudly instead of silently OOM-ing VMEM.
        raise ValueError(
            f"class axis C={C} is too large for a 128-wide HW tile within the "
            f"VMEM budget ({budget_bytes} bytes)")
    hw_floor = (HW // 128) * 128
    t_max = min(t_max, 64 * 1024, hw_floor)          # never wider than HW
    # Prefer the largest 128-multiple <= t_max that divides HW exactly.
    floor = max(128, (t_max // 4 // 128) * 128)
    t = t_max
    while t >= floor:
        if HW % t == 0:
            return int(t)
        t -= 128
    return int(t_max)                                # fall back to masked tail


def focal_ce_loss(logits, target, alpha=None, gamma=0.2, reduction="mean"):
    """Pallas implementation of CrossEntropyFocalLoss.forward.

    logits: (N, C, H, W) or (N, C) float array (kept in its native dtype).
    target: (N, H, W) or (N,) int array of class indices in [0, C).
    """
    if reduction not in ("mean", "sum"):
        raise NotImplementedError("only 'mean' and 'sum' reductions")
        # TODO(synk): reduction='none' would need a per-pixel (N, HW) output.

    if logits.ndim > 2:
        N, C = logits.shape[0], logits.shape[1]
        x = logits.reshape(N, C, -1)                 # NCHW -> (N, C, HW), free
    else:
        # Small 2-D case: make classes the sublane axis (single copy).
        MN, C = logits.shape
        x = jnp.swapaxes(logits, 0, 1)[None]         # (1, C, M)
        N = 1
    HW = x.shape[2]
    M_total = N * HW

    t = target.reshape(N, 1, HW).astype(jnp.int32)

    itemsize = jnp.dtype(x.dtype).itemsize
    tile_budget, vmem_limit = _vmem_budgets()
    tm_hw = _choose_tile(C, HW, itemsize, tile_budget)
    n_hw = pl.cdiv(HW, tm_hw)
    needs_mask = (HW % tm_hw) != 0

    # Megacore: when the batch axis alone cannot fill both v7x TensorCores
    # (odd N, incl. N == 1), split the HW tiles into two parallel chunks.
    num_chunks = 2 if (N % 2 == 1 and n_hw >= 2 and n_hw % 2 == 0) else 1
    tiles_per_chunk = n_hw // num_chunks

    has_alpha = alpha is not None
    in_specs = [
        pl.BlockSpec((1, C, tm_hw),
                     lambda n, p, i, tpc=tiles_per_chunk: (n, 0, p * tpc + i)),
        pl.BlockSpec((1, 1, tm_hw),
                     lambda n, p, i, tpc=tiles_per_chunk: (n, 0, p * tpc + i)),
    ]
    args = [x, t]
    if has_alpha:
        alpha_arr = jnp.asarray(alpha, jnp.float32).reshape(C, 1)
        in_specs.append(pl.BlockSpec((C, 1), lambda n, p, i: (0, 0)))
        args.append(alpha_arr)

    kernel = functools.partial(
        _focal_ce_kernel, gamma=float(gamma), hw_valid=int(HW),
        tm_hw=int(tm_hw), tiles_per_chunk=int(tiles_per_chunk),
        has_alpha=has_alpha, needs_mask=needs_mask)

    cost = pl.CostEstimate(
        flops=12 * N * C * HW,
        transcendentals=N * HW * (C + 4),
        bytes_accessed=int(x.size) * itemsize + int(t.size) * 4
                       + N * num_chunks * tm_hw * 4,
    )

    out = pl.pallas_call(
        kernel,
        out_shape=jax.ShapeDtypeStruct((N * num_chunks, 1, tm_hw), jnp.float32),
        grid_spec=pltpu.PrefetchScalarGridSpec(
            num_scalar_prefetch=0,
            grid=(N, num_chunks, tiles_per_chunk),
            in_specs=in_specs,
            out_specs=pl.BlockSpec(
                (1, 1, tm_hw),
                lambda n, p, i, nc=num_chunks: (n * nc + p, 0, 0)),
        ),
        compiler_params=pltpu.CompilerParams(
            dimension_semantics=("parallel", "parallel", "arbitrary"),
            vmem_limit_bytes=vmem_limit,
        ),
        cost_estimate=cost,
    )(*args)

    total = jnp.sum(out)                             # tiny partial-sum reduce
    if reduction == "mean":
        return total / M_total
    return total


def _reference(logits, target, alpha=None, gamma=0.2, reduction="mean"):
    if logits.ndim > 2:
        N, C = logits.shape[0], logits.shape[1]
        x = logits.reshape(N, C, -1).transpose(0, 2, 1).reshape(-1, C)
    else:
        C = logits.shape[1]
        x = logits
    t = target.reshape(-1)
    p = jax.nn.softmax(x.astype(jnp.float32), axis=1)
    p_t = jnp.take_along_axis(p, t[:, None], axis=1)[:, 0]
    log_gt = jnp.log(p_t)
    if alpha is not None:
        log_gt = log_gt * jnp.asarray(alpha, jnp.float32)[t]
    loss = -1.0 * (1.0 - p_t) ** gamma * log_gt
    if reduction == "mean":
        return loss.mean()
    return loss.sum()


if __name__ == "__main__":
    key = jax.random.PRNGKey(0)
    k1, k2, k3, k4, k5, k6 = jax.random.split(key, 6)

    # 1) NCHW, mean reduction, no alpha.
    N, C, H, W = 2, 4, 16, 16
    logits = jax.random.normal(k1, (N, C, H, W), dtype=jnp.float32)
    target = jax.random.randint(k2, (N, H, W), 0, C, dtype=jnp.int32)
    loss = jax.block_until_ready(
        focal_ce_loss(logits, target, alpha=None, gamma=0.2, reduction="mean"))
    ref = _reference(logits, target, None, 0.2, "mean")
    assert jnp.allclose(loss, ref, rtol=1e-3, atol=1e-3), (loss, ref)

    # 2) sum reduction with per-class alpha.
    alpha = jnp.array([0.25, 0.5, 0.75, 1.0], jnp.float32)
    loss_a = jax.block_until_ready(
        focal_ce_loss(logits, target, alpha=alpha, gamma=0.2, reduction="sum"))
    ref_a = _reference(logits, target, alpha, 0.2, "sum")
    assert jnp.allclose(loss_a, ref_a, rtol=1e-3, atol=1e-2), (loss_a, ref_a)

    # 3) odd batch + non-multiple-of-tile HW (exercises chunk split + tail mask).
    N2, C2, H2, W2 = 1, 5, 20, 20
    logits2 = jax.random.normal(k3, (N2, C2, H2, W2), dtype=jnp.float32)
    target2 = jax.random.randint(k4, (N2, H2, W2), 0, C2, dtype=jnp.int32)
    loss2 = jax.block_until_ready(
        focal_ce_loss(logits2, target2, alpha=None, gamma=0.2, reduction="mean"))
    ref2 = _reference(logits2, target2, None, 0.2, "mean")
    assert jnp.allclose(loss2, ref2, rtol=1e-3, atol=1e-3), (loss2, ref2)

    # 4) plain 2-D logits path.
    logits3 = jax.random.normal(k5, (8, 5), dtype=jnp.float32)
    target3 = jax.random.randint(k6, (8,), 0, 5, dtype=jnp.int32)
    loss3 = jax.block_until_ready(
        focal_ce_loss(logits3, target3, alpha=None, gamma=0.2, reduction="mean"))
    ref3 = _reference(logits3, target3, None, 0.2, "mean")
    assert jnp.allclose(loss3, ref3, rtol=1e-3, atol=1e-3), (loss3, ref3)

    print("KERNEL_OK")
</pallas_src>

<mosaic_0001>
module attributes {stable_mosaic.version = 11 : i64} {
  func.func @_focal_ce_kernel(%arg0: i32, %arg1: i32, %arg2: i32, %arg3: memref<1x4x256xf32, #tpu.memory_space<vmem>>, %arg4: memref<1x1x256xi32, #tpu.memory_space<vmem>>, %arg5: memref<1x1x256xf32, #tpu.memory_space<vmem>>) attributes {dimension_semantics = [#tpu.dimension_semantics<parallel>, #tpu.dimension_semantics<parallel>, #tpu.dimension_semantics<arbitrary>], iteration_bounds = array<i64: 2, 1, 1>, scalar_prefetch = 0 : i64, scratch_operands = 0 : i64, tpu.core_type = #tpu.core_type<tc>, window_params = [{transform_indices = @transform_0, window_bounds = array<i64: 1, 4, 256>}, {transform_indices = @transform_1, window_bounds = array<i64: 1, 1, 256>}, {transform_indices = @transform_2, window_bounds = array<i64: 1, 1, 256>}]} {
    %c0_i32 = arith.constant 0 : i32
    %0 = arith.cmpi eq, %arg2, %c0_i32 : i32
    %1 = arith.extui %0 : i1 to i32
    %c0_i32_0 = arith.constant 0 : i32
    %2 = arith.cmpi ne, %1, %c0_i32_0 : i32
    scf.if %2 {
      %cst_21 = arith.constant 0.000000e+00 : f32
      %43 = vector.broadcast %cst_21 : f32 to vector<1x1x256xf32>
      %c0_22 = arith.constant 0 : index
      %c0_23 = arith.constant 0 : index
      %c0_24 = arith.constant 0 : index
      %44 = vector.load %arg5[%c0_22, %c0_23, %c0_24] : memref<1x1x256xf32, #tpu.memory_space<vmem>>, vector<1x1x256xf32>
      tpu.vector_store %arg5[%c0_22, %c0_23, %c0_24], %43 {strides = array<i32>} : memref<1x1x256xf32, #tpu.memory_space<vmem>>, vector<1x1x256xf32>,
    } else {
    }
    %c0 = arith.constant 0 : index
    %c0_1 = arith.constant 0 : index
    %c0_2 = arith.constant 0 : index
    %3 = vector.load %arg3[%c0, %c0_1, %c0_2] : memref<1x4x256xf32, #tpu.memory_space<vmem>>, vector<1x4x256xf32>
    %4 = vector.shape_cast %3 : vector<1x4x256xf32> to vector<4x256xf32>
    %c0_3 = arith.constant 0 : index
    %c0_4 = arith.constant 0 : index
    %c0_5 = arith.constant 0 : index
    %5 = vector.load %arg4[%c0_3, %c0_4, %c0_5] : memref<1x1x256xi32, #tpu.memory_space<vmem>>, vector<1x1x256xi32>
    %6 = vector.shape_cast %5 : vector<1x1x256xi32> to vector<1x256xi32>
    %cst = arith.constant dense<0xFF800000> : vector<256xf32>
    %7 = vector.multi_reduction <maximumf>, %4, %cst [0] : vector<4x256xf32> to vector<256xf32>
    %8 = vector.shape_cast %7 : vector<256xf32> to vector<1x256xf32>
    %9 = vector.broadcast %8 : vector<1x256xf32> to vector<4x256xf32>
    %10 = arith.subf %4, %9 : vector<4x256xf32>
    %11 = math.exp %10 : vector<4x256xf32>
    %cst_6 = arith.constant dense<0.000000e+00> : vector<256xf32>
    %12 = vector.multi_reduction <add>, %11, %cst_6 [0] : vector<4x256xf32> to vector<256xf32>
    %13 = vector.shape_cast %12 : vector<256xf32> to vector<1x256xf32>
    %14 = tpu.iota {dimensions = array<i32: 0>} : vector<4x256xi32>
    %15 = vector.broadcast %6 : vector<1x256xi32> to vector<4x256xi32>
    %16 = arith.cmpi eq, %14, %15 : vector<4x256xi32>
    %cst_7 = arith.constant 0.000000e+00 : f32
    %17 = vector.broadcast %cst_7 : f32 to vector<4x256xf32>
    %18 = arith.select %16, %4, %17 : vector<4x256xi1>, vector<4x256xf32>
    %cst_8 = arith.constant dense<0.000000e+00> : vector<256xf32>
    %19 = vector.multi_reduction <add>, %18, %cst_8 [0] : vector<4x256xf32> to vector<256xf32>
    %20 = vector.shape_cast %19 : vector<256xf32> to vector<1x256xf32>
    %cst_9 = arith.constant 0.000000e+00 : f32
    %21 = vector.broadcast %cst_9 : f32 to vector<4x256xf32>
    %22 = arith.select %16, %11, %21 : vector<4x256xi1>, vector<4x256xf32>
    %cst_10 = arith.constant dense<0.000000e+00> : vector<256xf32>
    %23 = vector.multi_reduction <add>, %22, %cst_10 [0] : vector<4x256xf32> to vector<256xf32>
    %24 = vector.shape_cast %23 : vector<256xf32> to vector<1x256xf32>
    %25 = arith.subf %20, %8 : vector<1x256xf32>
    %26 = math.log %13 : vector<1x256xf32>
    %27 = arith.subf %25, %26 : vector<1x256xf32>
    %28 = tpu.reciprocal %13 {approx = true} : vector<1x256xf32> -> vector<1x256xf32>
    %29 = arith.mulf %24, %28 : vector<1x256xf32>
    %cst_11 = arith.constant 1.000000e+00 : f32
    %30 = vector.broadcast %cst_11 : f32 to vector<1x256xf32>
    %31 = arith.subf %30, %29 : vector<1x256xf32>
    %cst_12 = arith.constant 0.000000e+00 : f32
    %32 = vector.broadcast %cst_12 : f32 to vector<1x256xf32>
    %33 = arith.maximumf %31, %32 : vector<1x256xf32>
    %cst_13 = arith.constant 2.000000e-01 : f32
    %34 = vector.broadcast %cst_13 : f32 to vector<1x256xf32>
    %35 = math.powf %33, %34 : vector<1x256xf32>
    %cst_14 = arith.constant 0.000000e+00 : f32
    %36 = vector.broadcast %cst_14 : f32 to vector<1x256xf32>
    %37 = arith.subf %36, %35 : vector<1x256xf32>
    %38 = arith.mulf %37, %27 : vector<1x256xf32>
    %c0_15 = arith.constant 0 : index
    %c0_16 = arith.constant 0 : index
    %c0_17 = arith.constant 0 : index
    %39 = vector.load %arg5[%c0_15, %c0_16, %c0_17] : memref<1x1x256xf32, #tpu.memory_space<vmem>>, vector<1x1x256xf32>
    %40 = vector.shape_cast %38 : vector<1x256xf32> to vector<1x1x256xf32>
    %41 = arith.addf %39, %40 : vector<1x1x256xf32>
    %c0_18 = arith.constant 0 : index
    %c0_19 = arith.constant 0 : index
    %c0_20 = arith.constant 0 : index
    %42 = vector.load %arg5[%c0_18, %c0_19, %c0_20] : memref<1x1x256xf32, #tpu.memory_space<vmem>>, vector<1x1x256xf32>
    tpu.vector_store %arg5[%c0_18, %c0_19, %c0_20], %41 {strides = array<i32>} : memref<1x1x256xf32, #tpu.memory_space<vmem>>, vector<1x1x256xf32>,
    return
  }
  func.func @transform_0(%arg0: i32, %arg1: i32, %arg2: i32) -> (i32, i32, i32) {
    %c1_i32 = arith.constant 1 : i32
    %0 = arith.muli %arg1, %c1_i32 : i32
    %1 = arith.addi %0, %arg2 : i32
    %c0_i32 = arith.constant 0 : i32
    %c0_i32_0 = arith.constant 0 : i32
    return %arg0, %c0_i32, %1 : i32, i32, i32
  }
  func.func @transform_1(%arg0: i32, %arg1: i32, %arg2: i32) -> (i32, i32, i32) {
    %c1_i32 = arith.constant 1 : i32
    %0 = arith.muli %arg1, %c1_i32 : i32
    %1 = arith.addi %0, %arg2 : i32
    %c0_i32 = arith.constant 0 : i32
    %c0_i32_0 = arith.constant 0 : i32
    return %arg0, %c0_i32, %1 : i32, i32, i32
  }
  func.func @transform_2(%arg0: i32, %arg1: i32, %arg2: i32) -> (i32, i32, i32) {
    %c1_i32 = arith.constant 1 : i32
    %0 = arith.muli %arg0, %c1_i32 : i32
    %1 = arith.addi %0, %arg1 : i32
    %c0_i32 = arith.constant 0 : i32
    %c0_i32_0 = arith.constant 0 : i32
    %c0_i32_1 = arith.constant 0 : i32
    return %1, %c0_i32, %c0_i32_0 : i32, i32, i32
  }
}

</mosaic_0001>

<llo_original>
// kernel: tpu_custom_call.1
$region0: #{tpu_custom_call.1}
  #allocation0 [shape = 'u32[]', space=smem, size = 0x4, offset = 0x4, fixed_abs, tag = 'smem constant byte address 0x4 - core index']
  #allocation1 [shape = 'u32[144,128]{1,0:T(1,128)}', space=vmem, size = 0x12000, scoped, tag = 'internal scratch']
  %s0 = inlined_call_operand.hbm [shape: f32[2,4,256], index: 0, kind: input, shape index: {}]
  %s1 = inlined_call_operand.hbm [shape: s32[2,1,256], index: 1, kind: input, shape index: {}]
  %s2 = inlined_call_operand.hbm [shape: f32[2,1,256], index: 2, kind: output, shape index: {}]
  %s3 = sld [smem:[#allocation0]]
  $region53: #{tpu_custom_call.1} parent=0
    _
  %s5 = ssub.s32 1, %s3
  %s6 = scalar_select 0, %s5, %s3
  $region1: #{tpu_custom_call.1} parent=0
    #allocation2 [shape = 'u8[8192]{0}', space=vmem, size = 0x2000, scoped, tag = 'input window, operand 0']
    #allocation3 [shape = 's32[2]{0}', space=sflag, size = 0x8, scoped, tag = 'scoped memory for tpu_custom_call.1']
    #allocation4 [shape = 's32[2]{0}', space=sflag, size = 0x8, scoped, tag = 'scoped memory for tpu_custom_call.1']
    #allocation5 [shape = 'u8[2048]{0}', space=vmem, size = 0x800, scoped, tag = 'input window, operand 1']
    #allocation6 [shape = 's32[2]{0}', space=sflag, size = 0x8, scoped, tag = 'scoped memory for tpu_custom_call.1']
    #allocation7 [shape = 'u8[2048]{0}', space=vmem, size = 0x800, scoped, tag = 'output window, operand 0']
    %7 = vsyncpa [#allocation3], 0
    %s8 = scalar_lea.sflag [#allocation3], 1
    %9 = vsyncpa %s8, 0
    %10 = vsyncpa [#allocation6], 0
    %s11 = scalar_lea.sflag [#allocation6], 1
    %12 = vsyncpa %s11, 0
    %13 = vsyncpa [#allocation4], 0
    %s14 = scalar_lea.sflag [#allocation4], 1
    %15 = vsyncpa %s14, 0
    loop: start=0, step=1, limit=4
    $region2: #{tpu_custom_call.1} parent=1 // loop_pre_header
      _
    $region3: #{tpu_custom_call.1} parent=1 // loop_header
      %s17 = sphi 0, %s21
      %p18 = scmp.ge.s32.totalorder %s17, 4
      %s24 = sphi 0, %s43
      %s25 = sphi 0, %s39
      %s26 = sphi 0, %s35
      %s27 = sphi 0, %s24
      %s28 = sphi 0, %s25
      %s29 = sphi 0, %s26
      %s30 = sphi 0, %s27
      %s31 = sphi 0, %s28
      %s32 = sphi 0, %s29
      %s50 = sphi 0, %s52
      %s53 = sphi 0, %s50
      %s54 = sphi 0, %s53
      %s70 = sphi 0, %s54
      %s80 = sphi 0, %s82
      %s83 = sphi 0, %s80
      %s84 = sphi 0, %s83
      %s100 = sphi 0, %s84
      %s108 = sphi 0, %s110
      %s111 = sphi 0, %s108
      %s112 = sphi 0, %s111
      %s128 = sphi 0, %s112
    $region4: #{tpu_custom_call.1} parent=1 // loop_header_branch
      %20 = sbr.rel (%p18) target = $region8
    $region5: #{tpu_custom_call.1} parent=1 // loop_body
      %s22 = ssub.s32 %s17, 1
      %s23 = ssub.s32 %s17, 2
      %s33 = sadd.s32 1, %s26
      %p34 = scmp.ge.s32.totalorder %s33, 1
      %s35 = scalar_select %p34, 0, %s33
      %s36 = sadd.s32 1, %s25
      %s37 = scalar_select %p34, %s36, %s25
      %p38 = scmp.ge.s32.totalorder %s37, 1
      %s39 = scalar_select %p38, 0, %s37
      %s40 = sadd.s32 1, %s24
      %s41 = scalar_select %p38, %s40, %s24
      %p42 = scmp.ge.s32.totalorder %s41, 2
      %s43 = scalar_select %p42, 0, %s41
      %s44 = sadd.s32 %s25, %s26
      %s45 = sadd.s32 %s39, %s35
      %s46 = ssub.s32 %s24, %s43
      %s47 = ssub.s32 %s44, %s45
      %s48 = sor.u32 %s46, %s47
      %p49 = scmp.eq.s32.totalorder %s48, 0
      %s51 = sadd.s32 %s50, 1
      %s52 = scalar_select %p49, %s50, %s51
      %p55 = pneg %p49
      %p56 = scmp.eq.s32.totalorder %s17, 1
      %p57 = por %p55, %p56
      %p58 = scmp.ne.s32.totalorder %s50, %s53
      %p59 = scmp.eq.s32.totalorder %s17, 0
      %p60 = por %p58, %p59
      %p61 = scmp.ne.s32.totalorder %s50, %s53
      %p62 = scmp.eq.s32.totalorder %s22, 1
      %p63 = por %p61, %p62
      %p64 = scmp.ne.s32.totalorder %s53, %s54
      %p65 = scmp.eq.s32.totalorder %s22, 0
      %p66 = por %p64, %p65
      %p67 = scmp.ne.s32.totalorder %s53, %s54
      %p68 = scmp.eq.s32.totalorder %s23, 1
      %p69 = por %p67, %p68
      %p71 = scmp.ne.s32.totalorder %s54, %s70
      %p72 = scmp.eq.s32.totalorder %s23, 0
      %p73 = por %p71, %p72
      %s74 = sadd.s32 %s25, %s26
      %s75 = sadd.s32 %s39, %s35
      %s76 = ssub.s32 %s24, %s43
      %s77 = ssub.s32 %s74, %s75
      %s78 = sor.u32 %s76, %s77
      %p79 = scmp.eq.s32.totalorder %s78, 0
      %s81 = sadd.s32 %s80, 1
      %s82 = scalar_select %p79, %s80, %s81
      %p85 = pneg %p79
      %p86 = scmp.eq.s32.totalorder %s17, 1
      %p87 = por %p85, %p86
      %p88 = scmp.ne.s32.totalorder %s80, %s83
      %p89 = scmp.eq.s32.totalorder %s17, 0
      %p90 = por %p88, %p89
      %p91 = scmp.ne.s32.totalorder %s80, %s83
      %p92 = scmp.eq.s32.totalorder %s22, 1
      %p93 = por %p91, %p92
      %p94 = scmp.ne.s32.totalorder %s83, %s84
      %p95 = scmp.eq.s32.totalorder %s22, 0
      %p96 = por %p94, %p95
      %p97 = scmp.ne.s32.totalorder %s83, %s84
      %p98 = scmp.eq.s32.totalorder %s23, 1
      %p99 = por %p97, %p98
      %p101 = scmp.ne.s32.totalorder %s84, %s100
      %p102 = scmp.eq.s32.totalorder %s23, 0
      %p103 = por %p101, %p102
      %s104 = sadd.s32 %s24, %s25
      %s105 = sadd.s32 %s43, %s39
      %s106 = ssub.s32 %s104, %s105
      %p107 = scmp.eq.s32.totalorder %s106, 0
      %s109 = sadd.s32 %s108, 1
      %s110 = scalar_select %p107, %s108, %s109
      %p113 = pneg %p107
      %p114 = scmp.eq.s32.totalorder %s17, 1
      %p115 = por %p113, %p114
      %p116 = scmp.ne.s32.totalorder %s108, %s111
      %p117 = scmp.eq.s32.totalorder %s17, 0
      %p118 = por %p116, %p117
      %p119 = scmp.ne.s32.totalorder %s108, %s111
      %p120 = scmp.eq.s32.totalorder %s22, 1
      %p121 = por %p119, %p120
      %p122 = scmp.ne.s32.totalorder %s111, %s112
      %p123 = scmp.eq.s32.totalorder %s22, 0
      %p124 = por %p122, %p123
      %p125 = scmp.ne.s32.totalorder %s111, %s112
      %p126 = scmp.eq.s32.totalorder %s23, 1
      %p127 = por %p125, %p126
      %p129 = scmp.ne.s32.totalorder %s112, %s128
      %p130 = scmp.eq.s32.totalorder %s23, 0
      %p131 = por %p129, %p130
      %p132 = scmp.le.s32.totalorder 1, %s17
      %p133 = scmp.lt.s32.totalorder %s17, 3
      %p134 = pnand %p132, %p133
      %p135 = pneg %p134
      // Predicated region
      $region9: #{tpu_custom_call.1} parent=5 // pred_check
        _
      $region10: #{tpu_custom_call.1} parent=5 // pred_check_branch
        %137 = sbr.rel (%p134) target = $region12
      $region11: #{tpu_custom_call.1} parent=5 // pred_region
        %s138 = ssub.s32 %s17, 1
      $region12: #{tpu_custom_call.1} parent=5 // pred_fallthru
        _
      %p139 = scmp.lt.s32.totalorder %s17, 2
      // Predicated region
      $region13: #{tpu_custom_call.1} parent=5 // pred_check
        %p140 = pneg %p139
      $region14: #{tpu_custom_call.1} parent=5 // pred_check_branch
        %142 = sbr.rel (%p140) target = $region16
      $region15: #{tpu_custom_call.1} parent=5 // pred_region
        // Predicated region
        $region17: #{tpu_custom_call.1} parent=15 // pred_check
          %p143 = pneg %p60
        $region18: #{tpu_custom_call.1} parent=15 // pred_check_branch
          %145 = sbr.rel (%p143) target = $region20
        $region19: #{tpu_custom_call.1} parent=15 // pred_region
          %s146 = sand.u32 %s50, 1
          %s147 = scalar_lea.sflag [#allocation3], %s146
          %s148 = sand.u32 %s50, 1
          %s149 = smul.addr %s148, 8
          %s150 = scalar_lea.vmem [#allocation2], %s149
          %s151 = sadd.s32 %s25, %s26
          %s152 = smul.u32 2, %s151
          %s154 = ssub.s32 128, 128
          %155 = vsyncadd %s147, %s154
          %s156 = smul.addr %s24, 2
          %s157 = sadd.s32 %s152, %s156
          %s158 = smul.addr %s157, 64
          %s159 = scalar_lea.hbm %s0, %s158
          %s161 = sshll.u32 %s150, 4
          %s162 = int_to_ptr.vmem [resolvable:$true] %s161
          %164 = dma.hbm_to_vmem [thread:$0]  %s159, 128, %s162, %s147
        $region20: #{tpu_custom_call.1} parent=15 // pred_fallthru
          _
        // Predicated region
        $region21: #{tpu_custom_call.1} parent=15 // pred_check
          %p165 = pneg %p90
        $region22: #{tpu_custom_call.1} parent=15 // pred_check_branch
          %167 = sbr.rel (%p165) target = $region24
        $region23: #{tpu_custom_call.1} parent=15 // pred_region
          %s168 = sand.u32 %s80, 1
          %s169 = scalar_lea.sflag [#allocation6], %s168
          %s170 = sand.u32 %s80, 1
          %s171 = smul.addr %s170, 2
          %s172 = scalar_lea.vmem [#allocation5], %s171
          %s173 = sadd.s32 %s25, %s26
          %s174 = smul.u32 2, %s173
          %s176 = ssub.s32 32, 32
          %177 = vsyncadd %s169, %s176
          %s178 = smul.addr %s24, 2
          %s179 = sadd.s32 %s174, %s178
          %s180 = smul.addr %s179, 16
          %s181 = scalar_lea.hbm %s1, %s180
          %s183 = sshll.u32 %s172, 4
          %s184 = int_to_ptr.vmem [resolvable:$true] %s183
          %186 = dma.hbm_to_vmem [thread:$0]  %s181, 32, %s184, %s169
        $region24: #{tpu_custom_call.1} parent=15 // pred_fallthru
          _
      $region16: #{tpu_custom_call.1} parent=5 // pred_fallthru
        _
      %p187 = scmp.le.s32.totalorder 1, %s17
      %p188 = scmp.lt.s32.totalorder %s17, 3
      %p189 = pnand %p187, %p188
      %p190 = pneg %p189
      // Predicated region
      $region25: #{tpu_custom_call.1} parent=5 // pred_check
        _
      $region26: #{tpu_custom_call.1} parent=5 // pred_check_branch
        %192 = sbr.rel (%p189) target = $region28
      $region27: #{tpu_custom_call.1} parent=5 // pred_region
        %s193 = ssub.s32 %s17, 1
        %s194 = sand.u32 %s53, 1
        %s195 = scalar_lea.sflag [#allocation3], %s194
        %s196 = sand.u32 %s53, 1
        %s197 = smul.addr %s196, 8
        %s198 = scalar_lea.vmem [#allocation2], %s197
        // Predicated region
        $region29: #{tpu_custom_call.1} parent=27 // pred_check
          %p199 = pneg %p66
        $region30: #{tpu_custom_call.1} parent=27 // pred_check_branch
          %201 = sbr.rel (%p199) target = $region32
        $region31: #{tpu_custom_call.1} parent=27 // pred_region
          %202 = dma.done %s195, 128
        $region32: #{tpu_custom_call.1} parent=27 // pred_fallthru
          _
        %s203 = sand.u32 %s83, 1
        %s204 = scalar_lea.sflag [#allocation6], %s203
        %s205 = sand.u32 %s83, 1
        %s206 = smul.addr %s205, 2
        %s207 = scalar_lea.vmem [#allocation5], %s206
        // Predicated region
        $region33: #{tpu_custom_call.1} parent=27 // pred_check
          %p208 = pneg %p96
        $region34: #{tpu_custom_call.1} parent=27 // pred_check_branch
          %210 = sbr.rel (%p208) target = $region36
        $region35: #{tpu_custom_call.1} parent=27 // pred_region
          %211 = dma.done %s204, 32
        $region36: #{tpu_custom_call.1} parent=27 // pred_fallthru
          _
        %s212 = sand.u32 %s53, 1
        %s213 = scalar_lea.sflag [#allocation3], %s212
        %s214 = sand.u32 %s53, 1
        %s215 = smul.addr %s214, 8
        %s216 = scalar_lea.vmem [#allocation2], %s215
        %p217 = pneg %p66
        %p218 = pneg %p63
        %s219 = sand.u32 %s83, 1
        %s220 = scalar_lea.sflag [#allocation6], %s219
        %s221 = sand.u32 %s83, 1
        %s222 = smul.addr %s221, 2
        %s223 = scalar_lea.vmem [#allocation5], %s222
        %p224 = pneg %p96
        %p225 = pneg %p93
        %p226 = pneg %p124
        %p227 = pneg %p121
        %s228 = sand.u32 %s111, 1
        %s229 = scalar_lea.sflag [#allocation4], %s228
        %s230 = sand.u32 %s111, 1
        %s231 = smul.addr %s230, 2
        %s232 = scalar_lea.vmem [#allocation7], %s231
        %s233 = sadd.s32 %s28, %s29
        %s234 = smul.u32 2, %s233
        %s235 = sadd.s32 %s28, %s29
        %s236 = smul.u32 2, %s235
        %s237 = sadd.s32 %s27, %s28
        %p238 = scmp.eq.s32.totalorder %s29, 0
        // Predicated region
        $region37: #{tpu_custom_call.1} parent=27 // pred_check
          %p239 = pneg %p238
        $region38: #{tpu_custom_call.1} parent=27 // pred_check_branch
          %241 = sbr.rel (%p239) target = $region40
        $region39: #{tpu_custom_call.1} parent=27 // pred_region
          %v242 = vlaneseq
          %vm243 = vcmp.ge.s32.totalorder %v242, 0
          %vm244 = vcmp.lt.s32.totalorder %v242, 256
          %vm245 = vmand %vm243, %vm244
          %246 = vst.msk [vmem:[%s232] sm:$0x3] %vm245, 0.0
        $region40: #{tpu_custom_call.1} parent=27 // pred_fallthru
          _
        %v247 = vld [vmem:[%s198] sm:$0xff]
        %v248 = vld [vmem:[%s207] sm:$0x3]
        %v250 = vcombine.high %v247, %v247
        %vm252 = vcmask 1043456
        %v253 = vsel %vm252, %v247, -inf
        %v254 = vrot.slane %v253, 4
        %v255 = vmax.f32 %v253, %v254
        %v256 = vrot.slane %v255, 2
        %v257 = vmax.f32 %v255, %v256
        %v258 = vrot.slane %v257, 1
        %v259 = vmax.f32 %v257, %v258
        %v260 = vsel %vm252, %v250, -inf
        %v261 = vrot.slane %v260, 4
        %v262 = vmax.f32 %v260, %v261
        %v263 = vrot.slane %v262, 2
        %v264 = vmax.f32 %v262, %v263
        %v265 = vrot.slane %v264, 1
        %v266 = vmax.f32 %v264, %v265
        %v269 = vcombine.low %v259, %v266
        %v271 = vsub.f32 %v247, %v269
        %v272 = vmul.f32 %v271, 1.442695
        %v273 = vpow.pop %v272
        %v275 = vcombine.high %v273, %v273
        %v277 = vsel %vm252, %v273, 0.0
        %v278 = vrot.slane %v277, 4
        %v279 = vadd.f32 %v277, %v278
        %v280 = vrot.slane %v279, 2
        %v281 = vadd.f32 %v279, %v280
        %v282 = vrot.slane %v281, 1
        %v283 = vadd.f32 %v281, %v282
        %v284 = vsel %vm252, %v275, 0.0
        %v285 = vrot.slane %v284, 4
        %v286 = vadd.f32 %v284, %v285
        %v287 = vrot.slane %v286, 2
        %v288 = vadd.f32 %v286, %v287
        %v289 = vrot.slane %v288, 1
        %v290 = vadd.f32 %v288, %v289
        %v291 = vlaneseq
        %v292 = vshrl.u32 %v291, 7
        %v293 = vlaneseq
        %v294 = vshrl.u32 %v293, 7
        %v295 = vsub.s32 0, %v294
        %v296 = vrot.slane %v248, %v295
        %v297 = vlaneseq
        %v298 = vshrl.u32 %v297, 7
        %v299 = vsub.s32 1, %v298
        %v300 = vrot.slane %v248, %v299
        %vm301 = vcmp.eq.s32.totalorder %v292, %v296
        %vm302 = vcmp.eq.s32.totalorder %v292, %v300
        %v303 = vsel %vm301, %v247, 0.0
        %v304 = vsel %vm302, %v250, 0.0
        %v305 = vsel %vm252, %v303, 0.0
        %v306 = vrot.slane %v305, 4
        %v307 = vadd.f32 %v305, %v306
        %v308 = vrot.slane %v307, 2
        %v309 = vadd.f32 %v307, %v308
        %v310 = vrot.slane %v309, 1
        %v311 = vadd.f32 %v309, %v310
        %v312 = vsel %vm252, %v304, 0.0
        %v313 = vrot.slane %v312, 4
        %v314 = vadd.f32 %v312, %v313
        %v315 = vrot.slane %v314, 2
        %v316 = vadd.f32 %v314, %v315
        %v317 = vrot.slane %v316, 1
        %v318 = vadd.f32 %v316, %v317
        %v319 = vsel %vm301, %v273, 0.0
        %v320 = vsel %vm302, %v275, 0.0
        %v321 = vsel %vm252, %v319, 0.0
        %v322 = vrot.slane %v321, 4
        %v323 = vadd.f32 %v321, %v322
        %v324 = vrot.slane %v323, 2
        %v325 = vadd.f32 %v323, %v324
        %v326 = vrot.slane %v325, 1
        %v327 = vadd.f32 %v325, %v326
        %v328 = vsel %vm252, %v320, 0.0
        %v329 = vrot.slane %v328, 4
        %v330 = vadd.f32 %v328, %v329
        %v331 = vrot.slane %v330, 2
        %v332 = vadd.f32 %v330, %v331
        %v333 = vrot.slane %v332, 1
        %v334 = vadd.f32 %v332, %v333
        %v335 = vsub.f32 %v311, %v259
        %v336 = vsub.f32 %v318, %v266
        %v337 = vlog2.pop %v283
        %v338 = vmul.f32 %v337, 0.6931472
        %v339 = vlog2.pop %v290
        %v340 = vmul.f32 %v339, 0.6931472
        %v341 = vsub.f32 %v335, %v338
        %v342 = vsub.f32 %v336, %v340
        %v343 = vrcp.pop %v283
        %v344 = vrcp.pop %v290
        %v345 = vmul.f32 %v327, %v343
        %v346 = vmul.f32 %v334, %v344
        %v347 = vsub.f32 1.0, %v345
        %v348 = vsub.f32 1.0, %v346
        %v349 = vmax.f32 %v347, 0.0
        %v350 = vmax.f32 %v348, 0.0
        %v351 = vpow.f32 %v349, 0.2
        %v352 = vpow.f32 %v350, 0.2
        %v353 = vsub.f32 0.0, %v351
        %v354 = vsub.f32 0.0, %v352
        %v355 = vmul.f32 %v353, %v341
        %v356 = vmul.f32 %v354, %v342
        %v357 = vld [vmem:[%s232] sm:$0x3]
        %v360 = vcombine.low %v355, %v356
        %v362 = vunpack.c.l.s4 1966171168
        %v363 = vunpack.c.0.s8 %v362
        %v364 = vlaneseq
        %v365 = vshrl.u32 %v364, 7
        %v366 = vsub.s32 %v363, %v365
        %v367 = vrot.slane %v360, %v366
        %v369 = vunpack.c.l.s4 1966171168
        %v370 = vunpack.c.0.s8 %v369
        %v371 = vlaneseq
        %v372 = vshrl.u32 %v371, 7
        %v373 = vsub.s32 %v370, %v372
        %v374 = vrot.slane %v367, %v373
        %v376 = vadd.f32 %v357, %v374
        %v377 = vlaneseq
        %vm378 = vcmp.ge.s32.totalorder %v377, 0
        %vm379 = vcmp.lt.s32.totalorder %v377, 256
        %vm380 = vmand %vm378, %vm379
        %381 = vst.msk [vmem:[%s232] sm:$0x3] %vm380, %v376
        %s382 = sand.u32 %s111, 1
        %s383 = scalar_lea.sflag [#allocation4], %s382
        %s384 = sand.u32 %s111, 1
        %s385 = smul.addr %s384, 2
        %s386 = scalar_lea.vmem [#allocation7], %s385
        // Predicated region
        $region41: #{tpu_custom_call.1} parent=27 // pred_check
          %p387 = pneg %p121
        $region42: #{tpu_custom_call.1} parent=27 // pred_check_branch
          %389 = sbr.rel (%p387) target = $region44
        $region43: #{tpu_custom_call.1} parent=27 // pred_region
          %s390 = sadd.s32 %s27, %s28
          %s392 = ssub.s32 32, 32
          %393 = vsyncadd %s383, %s392
          %s394 = smul.addr %s390, 2
          %s395 = smul.addr %s394, 16
          %s396 = scalar_lea.hbm %s2, %s395
          %s398 = sshll.u32 %s386, 4
          %s399 = int_to_ptr.vmem [resolvable:$true] %s398
          %401 = dma.vmem_to_hbm [thread:$0]  %s399, 32, %s396, %s383
        $region44: #{tpu_custom_call.1} parent=27 // pred_fallthru
          _
      $region28: #{tpu_custom_call.1} parent=5 // pred_fallthru
        _
      %p402 = scmp.le.s32.totalorder 2, %s17
      // Predicated region
      $region45: #{tpu_custom_call.1} parent=5 // pred_check
        %p403 = pneg %p402
      $region46: #{tpu_custom_call.1} parent=5 // pred_check_branch
        %405 = sbr.rel (%p403) target = $region48
      $region47: #{tpu_custom_call.1} parent=5 // pred_region
        %s406 = ssub.s32 %s17, 2
        // Predicated region
        $region49: #{tpu_custom_call.1} parent=47 // pred_check
          %p407 = pneg %p127
        $region50: #{tpu_custom_call.1} parent=47 // pred_check_branch
          %409 = sbr.rel (%p407) target = $region52
        $region51: #{tpu_custom_call.1} parent=47 // pred_region
          %s410 = sand.u32 %s112, 1
          %s411 = scalar_lea.sflag [#allocation4], %s410
          %s412 = sand.u32 %s112, 1
          %s413 = smul.addr %s412, 2
          %s414 = scalar_lea.vmem [#allocation7], %s413
          %415 = dma.done %s411, 32
        $region52: #{tpu_custom_call.1} parent=47 // pred_fallthru
          _
      $region48: #{tpu_custom_call.1} parent=5 // pred_fallthru
        _
    $region6: #{tpu_custom_call.1} parent=1 // loop_footer
      %s21 = sadd.s32 1, %s17
    $region7: #{tpu_custom_call.1} parent=1 // loop_footer_branch
      %16 = sbr.rel target = $region3
    $region8: #{tpu_custom_call.1} parent=1 // loop_exit
      _
    %416 = vsyncpa [#allocation3], 1
    %s417 = scalar_lea.sflag [#allocation3], 1
    %418 = vsyncpa %s417, 1
    %419 = vsyncpa [#allocation6], 1
    %s420 = scalar_lea.sflag [#allocation6], 1
    %421 = vsyncpa %s420, 1
    %422 = vsyncpa [#allocation4], 1
    %s423 = scalar_lea.sflag [#allocation4], 1
    %424 = vsyncpa %s423, 1

</llo_original>
